<compile_context>
chip_gen: v7x
topology: tpu7x:2x2x1
jax: 0.10.0
libtpu: 0.0.40
codegen_flags: <defaults>
</compile_context>

<pallas_src>
import functools

import jax
import jax.numpy as jnp
from jax import lax
from jax.experimental import pallas as pl
from jax.experimental.pallas import tpu as pltpu

# Deterministic "parameters" of the module (constructor args alpha, gamma).
ALPHA = 10.0
GAMMA = 2.0

LANES = 128
MAX_BLOCK_ROWS = 1024   # 1024 x 128 x 4B = 512 KiB per input per buffer
NSHARDS = 2             # megacore split on v7x; harmless serial loop elsewhere


def _round_up(a: int, b: int) -> int:
    return ((a + b - 1) // b) * b


def _make_kernel(gamma: float, n_valid: int, block_rows: int):
    """Build the mixed-loss kernel closed over static scalars.

    NOTE: n_valid is baked into the kernel closure; it is derived from x.shape
    inside jit, so a new shape simply retraces.  Do not feed dynamic shapes.
    """
    gamma = float(gamma)
    block_elems = block_rows * LANES

    def kernel(x_ref, t_ref, out_ref):
        s = pl.program_id(0)          # shard (parallel)
        j = pl.program_id(1)          # block within shard (reduction)
        nblk = pl.num_programs(1)

        @pl.when(j == 0)
        def _init():
            out_ref[...] = jnp.zeros_like(out_ref)

        x = x_ref[...].astype(jnp.float32)
        t = t_ref[...].astype(jnp.float32)

        # --- shared transcendentals (2 exp + 1 log + 1 reciprocal) ---
        xm = jnp.minimum(x, 0.0)       # = -max_val, max_val = clamp(-x, min=0)
        xp = jnp.minimum(-x, 0.0)      # = -x - max_val
        e1 = jnp.exp(xm)               # exp(-max_val)
        e2 = jnp.exp(xp)               # exp(-x - max_val)
        denom = e1 + e2                # = 1 + exp(-|x|)  in (1, 2]
        log_denom = jnp.log(denom)
        inv = 1.0 / denom

        # BCE-with-logits (stable form, identical to the torch code)
        bce = x - x * t - xm + log_denom
        # sigmoid(x) = exp(min(x,0)) / (1 + exp(-|x|))  (no overflow)
        sig = e1 * inv

        # focal weight exp(gamma * logsigmoid(-x*(2t-1))).
        # For binary targets (segmentation mask) |x*(2t-1)| == |x|, so
        # sigmoid(-x*(2t-1)) == where(t>0.5, e2, e1) / denom exactly.
        p = jnp.where(t > 0.5, e2, e1) * inv
        if gamma == 2.0:
            w = p * p
        elif gamma == 1.0:
            w = p
        else:
            # one extra exp, still reuses log_denom
            w = jnp.exp(gamma * (jnp.where(t > 0.5, xp, xm) - log_denom))
        focal = w * bce

        def rsum(v):
            # (block_rows,128) -> (block_rows//8, 8, 128), VPU tree-add to (8,128)
            return jnp.sum(v.reshape(-1, 8, LANES), axis=0)

        # Padded region of t is exactly zero, so sig*t and t need no mask.
        out_ref[0, 1] += rsum(sig * t)   # intersection partials
        out_ref[0, 3] += rsum(t)         # target-sum partials

        start = (s * nblk + j) * block_elems
        block_full = start + block_elems <= n_valid

        @pl.when(block_full)
        def _full():
            out_ref[0, 0] += rsum(focal)
            out_ref[0, 2] += rsum(sig)

        @pl.when(jnp.logical_not(block_full))
        def _partial():
            rid = lax.broadcasted_iota(jnp.int32, (block_rows, LANES), 0)
            lid = lax.broadcasted_iota(jnp.int32, (block_rows, LANES), 1)
            idx = start + rid * LANES + lid
            m = (idx < n_valid).astype(jnp.float32)
            out_ref[0, 0] += rsum(focal * m)
            out_ref[0, 2] += rsum(sig * m)

    return kernel


@functools.partial(jax.jit, static_argnames=("alpha", "gamma"))
def mixed_loss(x, target, alpha=ALPHA, gamma=GAMMA):
    n = x.size  # static Python int (from shape)
    xf = x.reshape(-1)
    tf = target.reshape(-1)
    if xf.dtype != jnp.float32:
        xf = xf.astype(jnp.float32)
    if tf.dtype != jnp.float32:
        tf = tf.astype(jnp.float32)

    rows = -(-n // LANES)
    block_rows = min(MAX_BLOCK_ROWS, max(8, _round_up(-(-rows // NSHARDS), 8)))
    rows_padded = _round_up(rows, NSHARDS * block_rows)
    pad = rows_padded * LANES - n
    if pad:
        xf = jnp.pad(xf, (0, pad))
        tf = jnp.pad(tf, (0, pad))
    x2 = xf.reshape(rows_padded, LANES)
    t2 = tf.reshape(rows_padded, LANES)

    nblk = rows_padded // (NSHARDS * block_rows)
    kernel = _make_kernel(float(gamma), n, block_rows)

    # Per-shard vector partial sums: [focal, sig*t, sig, t] x (8,128).
    parts = pl.pallas_call(
        kernel,
        out_shape=jax.ShapeDtypeStruct((NSHARDS, 4, 8, LANES), jnp.float32),
        grid=(NSHARDS, nblk),
        in_specs=[
            pl.BlockSpec((block_rows, LANES), lambda s, j: (s * nblk + j, 0)),
            pl.BlockSpec((block_rows, LANES), lambda s, j: (s * nblk + j, 0)),
        ],
        out_specs=pl.BlockSpec((1, 4, 8, LANES), lambda s, j: (s, 0, 0, 0)),
        compiler_params=pltpu.CompilerParams(
            dimension_semantics=("parallel", "arbitrary")
        ),
    )(x2, t2)

    # Tiny tail combine in plain JAX (a few KB): tree-reduce the vector
    # partials and apply the MixedLoss scalar formula.
    sums = jnp.sum(parts, axis=(0, 2, 3))           # (4,)
    focal_mean = sums[0] / n
    smooth = 1.0
    dice = (2.0 * sums[1] + smooth) / (sums[2] + sums[3] + smooth)
    return alpha * focal_mean - jnp.log(dice)


def _reference_mixed_loss(x, target, alpha=ALPHA, gamma=GAMMA):
    x = x.astype(jnp.float32)
    t = target.astype(jnp.float32)
    max_val = jnp.maximum(-x, 0.0)
    bce = x - x * t + max_val + jnp.log(jnp.exp(-max_val) + jnp.exp(-x - max_val))
    invprobs = jax.nn.log_sigmoid(-x * (t * 2.0 - 1.0))
    focal = jnp.mean(jnp.exp(invprobs * gamma) * bce)
    sig = jax.nn.sigmoid(x).reshape(-1)
    tf = t.reshape(-1)
    dice = (2.0 * jnp.sum(sig * tf) + 1.0) / (jnp.sum(sig) + jnp.sum(tf) + 1.0)
    return alpha * focal - jnp.log(dice)


if __name__ == "__main__":
    key = jax.random.PRNGKey(0)
    k1, k2 = jax.random.split(key)
    # NCHW-shaped logits and binary mask target (same shape, per FocalLoss check)
    x = jax.random.normal(k1, (2, 4, 16, 16), dtype=jnp.float32)
    t = (jax.random.uniform(k2, (2, 4, 16, 16)) > 0.5).astype(jnp.float32)

    loss = mixed_loss(x, t)
    jax.block_until_ready(loss)

    ref = _reference_mixed_loss(x, t)
    assert jnp.allclose(loss, ref, atol=1e-4, rtol=1e-4), (loss, ref)

    print("KERNEL_OK")
</pallas_src>

<mosaic_0001>
module attributes {stable_mosaic.version = 11 : i64} {
  func.func @kernel(%arg0: i32, %arg1: i32, %arg2: memref<8x128xf32, #tpu.memory_space<vmem>>, %arg3: memref<8x128xf32, #tpu.memory_space<vmem>>, %arg4: memref<1x4x8x128xf32, #tpu.memory_space<vmem>>) attributes {dimension_semantics = [#tpu.dimension_semantics<parallel>, #tpu.dimension_semantics<arbitrary>], iteration_bounds = array<i64: 2, 1>, scalar_prefetch = 0 : i64, scratch_operands = 0 : i64, tpu.core_type = #tpu.core_type<tc>, window_params = [{transform_indices = @transform_0, window_bounds = array<i64: 8, 128>}, {transform_indices = @transform_1, window_bounds = array<i64: 8, 128>}, {transform_indices = @transform_2, window_bounds = array<i64: 1, 4, 8, 128>}]} {
    %c0_i32 = arith.constant 0 : i32
    %0 = arith.cmpi eq, %arg1, %c0_i32 : i32
    %1 = arith.extui %0 : i1 to i32
    %c0_i32_0 = arith.constant 0 : i32
    %2 = arith.cmpi ne, %1, %c0_i32_0 : i32
    scf.if %2 {
      %cst_27 = arith.constant 0.000000e+00 : f32
      %55 = vector.broadcast %cst_27 : f32 to vector<1x4x8x128xf32>
      %c0_28 = arith.constant 0 : index
      %c0_29 = arith.constant 0 : index
      %c0_30 = arith.constant 0 : index
      %c0_31 = arith.constant 0 : index
      %56 = vector.load %arg4[%c0_28, %c0_29, %c0_30, %c0_31] : memref<1x4x8x128xf32, #tpu.memory_space<vmem>>, vector<1x4x8x128xf32>
      tpu.vector_store %arg4[%c0_28, %c0_29, %c0_30, %c0_31], %55 {strides = array<i32>} : memref<1x4x8x128xf32, #tpu.memory_space<vmem>>, vector<1x4x8x128xf32>,
    } else {
    }
    %c0 = arith.constant 0 : index
    %c0_1 = arith.constant 0 : index
    %3 = vector.load %arg2[%c0, %c0_1] : memref<8x128xf32, #tpu.memory_space<vmem>>, vector<8x128xf32>
    %c0_2 = arith.constant 0 : index
    %c0_3 = arith.constant 0 : index
    %4 = vector.load %arg3[%c0_2, %c0_3] : memref<8x128xf32, #tpu.memory_space<vmem>>, vector<8x128xf32>
    %cst = arith.constant 0.000000e+00 : f32
    %5 = vector.broadcast %cst : f32 to vector<8x128xf32>
    %6 = arith.minimumf %3, %5 : vector<8x128xf32>
    %cst_4 = arith.constant 0.000000e+00 : f32
    %7 = vector.broadcast %cst_4 : f32 to vector<8x128xf32>
    %8 = arith.subf %7, %3 : vector<8x128xf32>
    %cst_5 = arith.constant 0.000000e+00 : f32
    %9 = vector.broadcast %cst_5 : f32 to vector<8x128xf32>
    %10 = arith.minimumf %8, %9 : vector<8x128xf32>
    %11 = math.exp %6 : vector<8x128xf32>
    %12 = math.exp %10 : vector<8x128xf32>
    %13 = arith.addf %11, %12 : vector<8x128xf32>
    %14 = math.log %13 : vector<8x128xf32>
    %cst_6 = arith.constant 1.000000e+00 : f32
    %15 = vector.broadcast %cst_6 : f32 to vector<8x128xf32>
    %16 = arith.divf %15, %13 : vector<8x128xf32>
    %17 = arith.mulf %3, %4 : vector<8x128xf32>
    %18 = arith.subf %3, %17 : vector<8x128xf32>
    %19 = arith.subf %18, %6 : vector<8x128xf32>
    %20 = arith.addf %19, %14 : vector<8x128xf32>
    %21 = arith.mulf %11, %16 : vector<8x128xf32>
    %cst_7 = arith.constant 5.000000e-01 : f32
    %22 = vector.broadcast %cst_7 : f32 to vector<8x128xf32>
    %23 = arith.cmpf ogt, %4, %22 : vector<8x128xf32>
    %24 = arith.select %23, %12, %11 : vector<8x128xi1>, vector<8x128xf32>
    %25 = arith.mulf %24, %16 : vector<8x128xf32>
    %26 = arith.mulf %25, %25 : vector<8x128xf32>
    %27 = arith.mulf %26, %20 : vector<8x128xf32>
    %c0_8 = arith.constant 0 : index
    %c1 = arith.constant 1 : index
    %c0_9 = arith.constant 0 : index
    %c0_10 = arith.constant 0 : index
    %28 = vector.load %arg4[%c0_8, %c1, %c0_9, %c0_10] : memref<1x4x8x128xf32, #tpu.memory_space<vmem>>, vector<1x1x8x128xf32>
    %29 = vector.shape_cast %28 : vector<1x1x8x128xf32> to vector<8x128xf32>
    %30 = arith.mulf %21, %4 : vector<8x128xf32>
    %31 = vector.shape_cast %30 : vector<8x128xf32> to vector<1x8x128xf32>
    %cst_11 = arith.constant dense<0.000000e+00> : vector<8x128xf32>
    %32 = vector.multi_reduction <add>, %31, %cst_11 [0] : vector<1x8x128xf32> to vector<8x128xf32>
    %33 = arith.addf %29, %32 : vector<8x128xf32>
    %c0_12 = arith.constant 0 : index
    %c1_13 = arith.constant 1 : index
    %c0_14 = arith.constant 0 : index
    %c0_15 = arith.constant 0 : index
    %34 = vector.load %arg4[%c0_12, %c1_13, %c0_14, %c0_15] : memref<1x4x8x128xf32, #tpu.memory_space<vmem>>, vector<1x1x8x128xf32>
    %35 = vector.shape_cast %34 : vector<1x1x8x128xf32> to vector<8x128xf32>
    %36 = vector.shape_cast %33 : vector<8x128xf32> to vector<1x1x8x128xf32>
    tpu.vector_store %arg4[%c0_12, %c1_13, %c0_14, %c0_15], %36 {strides = array<i32>} : memref<1x4x8x128xf32, #tpu.memory_space<vmem>>, vector<1x1x8x128xf32>,
    %c0_16 = arith.constant 0 : index
    %c3 = arith.constant 3 : index
    %c0_17 = arith.constant 0 : index
    %c0_18 = arith.constant 0 : index
    %37 = vector.load %arg4[%c0_16, %c3, %c0_17, %c0_18] : memref<1x4x8x128xf32, #tpu.memory_space<vmem>>, vector<1x1x8x128xf32>
    %38 = vector.shape_cast %37 : vector<1x1x8x128xf32> to vector<8x128xf32>
    %39 = vector.shape_cast %4 : vector<8x128xf32> to vector<1x8x128xf32>
    %cst_19 = arith.constant dense<0.000000e+00> : vector<8x128xf32>
    %40 = vector.multi_reduction <add>, %39, %cst_19 [0] : vector<1x8x128xf32> to vector<8x128xf32>
    %41 = arith.addf %38, %40 : vector<8x128xf32>
    %c0_20 = arith.constant 0 : index
    %c3_21 = arith.constant 3 : index
    %c0_22 = arith.constant 0 : index
    %c0_23 = arith.constant 0 : index
    %42 = vector.load %arg4[%c0_20, %c3_21, %c0_22, %c0_23] : memref<1x4x8x128xf32, #tpu.memory_space<vmem>>, vector<1x1x8x128xf32>
    %43 = vector.shape_cast %42 : vector<1x1x8x128xf32> to vector<8x128xf32>
    %44 = vector.shape_cast %41 : vector<8x128xf32> to vector<1x1x8x128xf32>
    tpu.vector_store %arg4[%c0_20, %c3_21, %c0_22, %c0_23], %44 {strides = array<i32>} : memref<1x4x8x128xf32, #tpu.memory_space<vmem>>, vector<1x1x8x128xf32>,
    %c1_i32 = arith.constant 1 : i32
    %45 = arith.muli %arg0, %c1_i32 : i32
    %46 = arith.addi %45, %arg1 : i32
    %c1024_i32 = arith.constant 1024 : i32
    %47 = arith.muli %46, %c1024_i32 : i32
    %c1024_i32_24 = arith.constant 1024 : i32
    %48 = arith.addi %47, %c1024_i32_24 : i32
    %c2048_i32 = arith.constant 2048 : i32
    %49 = arith.cmpi sle, %48, %c2048_i32 : i32
    %50 = arith.extui %49 : i1 to i32
    %c0_i32_25 = arith.constant 0 : i32
    %51 = arith.cmpi ne, %50, %c0_i32_25 : i32
    scf.if %51 {
      %c0_27 = arith.constant 0 : index
      %c0_28 = arith.constant 0 : index
      %c0_29 = arith.constant 0 : index
      %c0_30 = arith.constant 0 : index
      %55 = vector.load %arg4[%c0_27, %c0_28, %c0_29, %c0_30] : memref<1x4x8x128xf32, #tpu.memory_space<vmem>>, vector<1x1x8x128xf32>
      %56 = vector.shape_cast %55 : vector<1x1x8x128xf32> to vector<8x128xf32>
      %57 = vector.shape_cast %27 : vector<8x128xf32> to vector<1x8x128xf32>
      %cst_31 = arith.constant dense<0.000000e+00> : vector<8x128xf32>
      %58 = vector.multi_reduction <add>, %57, %cst_31 [0] : vector<1x8x128xf32> to vector<8x128xf32>
      %59 = arith.addf %56, %58 : vector<8x128xf32>
      %c0_32 = arith.constant 0 : index
      %c0_33 = arith.constant 0 : index
      %c0_34 = arith.constant 0 : index
      %c0_35 = arith.constant 0 : index
      %60 = vector.load %arg4[%c0_32, %c0_33, %c0_34, %c0_35] : memref<1x4x8x128xf32, #tpu.memory_space<vmem>>, vector<1x1x8x128xf32>
      %61 = vector.shape_cast %60 : vector<1x1x8x128xf32> to vector<8x128xf32>
      %62 = vector.shape_cast %59 : vector<8x128xf32> to vector<1x1x8x128xf32>
      tpu.vector_store %arg4[%c0_32, %c0_33, %c0_34, %c0_35], %62 {strides = array<i32>} : memref<1x4x8x128xf32, #tpu.memory_space<vmem>>, vector<1x1x8x128xf32>,
      %c0_36 = arith.constant 0 : index
      %c2 = arith.constant 2 : index
      %c0_37 = arith.constant 0 : index
      %c0_38 = arith.constant 0 : index
      %63 = vector.load %arg4[%c0_36, %c2, %c0_37, %c0_38] : memref<1x4x8x128xf32, #tpu.memory_space<vmem>>, vector<1x1x8x128xf32>
      %64 = vector.shape_cast %63 : vector<1x1x8x128xf32> to vector<8x128xf32>
      %65 = vector.shape_cast %21 : vector<8x128xf32> to vector<1x8x128xf32>
      %cst_39 = arith.constant dense<0.000000e+00> : vector<8x128xf32>
      %66 = vector.multi_reduction <add>, %65, %cst_39 [0] : vector<1x8x128xf32> to vector<8x128xf32>
      %67 = arith.addf %64, %66 : vector<8x128xf32>
      %c0_40 = arith.constant 0 : index
      %c2_41 = arith.constant 2 : index
      %c0_42 = arith.constant 0 : index
      %c0_43 = arith.constant 0 : index
      %68 = vector.load %arg4[%c0_40, %c2_41, %c0_42, %c0_43] : memref<1x4x8x128xf32, #tpu.memory_space<vmem>>, vector<1x1x8x128xf32>
      %69 = vector.shape_cast %68 : vector<1x1x8x128xf32> to vector<8x128xf32>
      %70 = vector.shape_cast %67 : vector<8x128xf32> to vector<1x1x8x128xf32>
      tpu.vector_store %arg4[%c0_40, %c2_41, %c0_42, %c0_43], %70 {strides = array<i32>} : memref<1x4x8x128xf32, #tpu.memory_space<vmem>>, vector<1x1x8x128xf32>,
    } else {
    }
    %true = arith.constant true
    %52 = arith.xori %49, %true : i1
    %53 = arith.extui %52 : i1 to i32
    %c0_i32_26 = arith.constant 0 : i32
    %54 = arith.cmpi ne, %53, %c0_i32_26 : i32
    scf.if %54 {
      %55 = tpu.iota {dimensions = array<i32: 0>} : vector<8x128xi32>
      %56 = tpu.iota {dimensions = array<i32: 1>} : vector<8x128xi32>
      %c128_i32 = arith.constant 128 : i32
      %57 = vector.broadcast %c128_i32 : i32 to vector<8x128xi32>
      %58 = arith.muli %55, %57 : vector<8x128xi32>
      %59 = vector.broadcast %47 : i32 to vector<8x128xi32>
      %60 = arith.addi %59, %58 : vector<8x128xi32>
      %61 = arith.addi %60, %56 : vector<8x128xi32>
      %c2048_i32_27 = arith.constant 2048 : i32
      %62 = vector.broadcast %c2048_i32_27 : i32 to vector<8x128xi32>
      %63 = arith.cmpi slt, %61, %62 : vector<8x128xi32>
      %64 = arith.extui %63 : vector<8x128xi1> to vector<8x128xi32>
      %65 = arith.sitofp %64 : vector<8x128xi32> to vector<8x128xf32>
      %c0_28 = arith.constant 0 : index
      %c0_29 = arith.constant 0 : index
      %c0_30 = arith.constant 0 : index
      %c0_31 = arith.constant 0 : index
      %66 = vector.load %arg4[%c0_28, %c0_29, %c0_30, %c0_31] : memref<1x4x8x128xf32, #tpu.memory_space<vmem>>, vector<1x1x8x128xf32>
      %67 = vector.shape_cast %66 : vector<1x1x8x128xf32> to vector<8x128xf32>
      %68 = arith.mulf %27, %65 : vector<8x128xf32>
      %69 = vector.shape_cast %68 : vector<8x128xf32> to vector<1x8x128xf32>
      %cst_32 = arith.constant dense<0.000000e+00> : vector<8x128xf32>
      %70 = vector.multi_reduction <add>, %69, %cst_32 [0] : vector<1x8x128xf32> to vector<8x128xf32>
      %71 = arith.addf %67, %70 : vector<8x128xf32>
      %c0_33 = arith.constant 0 : index
      %c0_34 = arith.constant 0 : index
      %c0_35 = arith.constant 0 : index
      %c0_36 = arith.constant 0 : index
      %72 = vector.load %arg4[%c0_33, %c0_34, %c0_35, %c0_36] : memref<1x4x8x128xf32, #tpu.memory_space<vmem>>, vector<1x1x8x128xf32>
      %73 = vector.shape_cast %72 : vector<1x1x8x128xf32> to vector<8x128xf32>
      %74 = vector.shape_cast %71 : vector<8x128xf32> to vector<1x1x8x128xf32>
      tpu.vector_store %arg4[%c0_33, %c0_34, %c0_35, %c0_36], %74 {strides = array<i32>} : memref<1x4x8x128xf32, #tpu.memory_space<vmem>>, vector<1x1x8x128xf32>,
      %c0_37 = arith.constant 0 : index
      %c2 = arith.constant 2 : index
      %c0_38 = arith.constant 0 : index
      %c0_39 = arith.constant 0 : index
      %75 = vector.load %arg4[%c0_37, %c2, %c0_38, %c0_39] : memref<1x4x8x128xf32, #tpu.memory_space<vmem>>, vector<1x1x8x128xf32>
      %76 = vector.shape_cast %75 : vector<1x1x8x128xf32> to vector<8x128xf32>
      %77 = arith.mulf %21, %65 : vector<8x128xf32>
      %78 = vector.shape_cast %77 : vector<8x128xf32> to vector<1x8x128xf32>
      %cst_40 = arith.constant dense<0.000000e+00> : vector<8x128xf32>
      %79 = vector.multi_reduction <add>, %78, %cst_40 [0] : vector<1x8x128xf32> to vector<8x128xf32>
      %80 = arith.addf %76, %79 : vector<8x128xf32>
      %c0_41 = arith.constant 0 : index
      %c2_42 = arith.constant 2 : index
      %c0_43 = arith.constant 0 : index
      %c0_44 = arith.constant 0 : index
      %81 = vector.load %arg4[%c0_41, %c2_42, %c0_43, %c0_44] : memref<1x4x8x128xf32, #tpu.memory_space<vmem>>, vector<1x1x8x128xf32>
      %82 = vector.shape_cast %81 : vector<1x1x8x128xf32> to vector<8x128xf32>
      %83 = vector.shape_cast %80 : vector<8x128xf32> to vector<1x1x8x128xf32>
      tpu.vector_store %arg4[%c0_41, %c2_42, %c0_43, %c0_44], %83 {strides = array<i32>} : memref<1x4x8x128xf32, #tpu.memory_space<vmem>>, vector<1x1x8x128xf32>,
    } else {
    }
    return
  }
  func.func @transform_0(%arg0: i32, %arg1: i32) -> (i32, i32) {
    %c1_i32 = arith.constant 1 : i32
    %0 = arith.muli %arg0, %c1_i32 : i32
    %1 = arith.addi %0, %arg1 : i32
    %c0_i32 = arith.constant 0 : i32
    %c0_i32_0 = arith.constant 0 : i32
    return %1, %c0_i32 : i32, i32
  }
  func.func @transform_1(%arg0: i32, %arg1: i32) -> (i32, i32) {
    %c1_i32 = arith.constant 1 : i32
    %0 = arith.muli %arg0, %c1_i32 : i32
    %1 = arith.addi %0, %arg1 : i32
    %c0_i32 = arith.constant 0 : i32
    %c0_i32_0 = arith.constant 0 : i32
    return %1, %c0_i32 : i32, i32
  }
  func.func @transform_2(%arg0: i32, %arg1: i32) -> (i32, i32, i32, i32) {
    %c0_i32 = arith.constant 0 : i32
    %c0_i32_0 = arith.constant 0 : i32
    %c0_i32_1 = arith.constant 0 : i32
    %c0_i32_2 = arith.constant 0 : i32
    return %arg0, %c0_i32, %c0_i32_0, %c0_i32_1 : i32, i32, i32, i32
  }
}

</mosaic_0001>

<llo_original>
// kernel: mixed_loss.1
$region0: #{mixed_loss.1}
  #allocation0 [shape = 'u32[]', space=smem, size = 0x4, offset = 0x4, fixed_abs, tag = 'smem constant byte address 0x4 - core index']
  #allocation1 [shape = 'u32[144,128]{1,0:T(1,128)}', space=vmem, size = 0x12000, scoped, tag = 'internal scratch']
  %s0 = inlined_call_operand.vmem [shape: f32[16,128], index: 0, kind: input, shape index: {}]
  %s1 = inlined_call_operand.vmem [shape: f32[16,128], index: 1, kind: input, shape index: {}]
  %s2 = inlined_call_operand.vmem [shape: f32[2,4,8,128], index: 2, kind: output, shape index: {}]
  %s3 = sld [smem:[#allocation0]]
  $region53: #{mixed_loss.1} parent=0
    _
  %s5 = ssub.s32 1, %s3
  %s6 = scalar_select 0, %s5, %s3
  loop: start=0, step=1, limit=4
  $region2: #{mixed_loss.1} parent=0 // loop_pre_header
    _
  $region3: #{mixed_loss.1} parent=0 // loop_header
    %s8 = sphi 0, %s12
    %p9 = scmp.ge.s32.totalorder %s8, 4
    %s15 = sphi 0, %s27
    %s16 = sphi 0, %s23
    %s17 = sphi 0, %s15
    %s18 = sphi 0, %s16
    %s19 = sphi 0, %s17
    %s20 = sphi 0, %s18
    %s32 = sphi 0, %s34
    %s35 = sphi 0, %s32
    %s36 = sphi 0, %s35
    %s52 = sphi 0, %s36
    %s60 = sphi 0, %s62
    %s63 = sphi 0, %s60
    %s64 = sphi 0, %s63
    %s80 = sphi 0, %s64
    %s86 = sphi 0, %s88
    %s89 = sphi 0, %s86
    %s90 = sphi 0, %s89
    %s106 = sphi 0, %s90
  $region4: #{mixed_loss.1} parent=0 // loop_header_branch
    %11 = sbr.rel (%p9) target = $region8
  $region5: #{mixed_loss.1} parent=0 // loop_body
    %s13 = ssub.s32 %s8, 1
    %s14 = ssub.s32 %s8, 2
    %s21 = sadd.s32 1, %s16
    %p22 = scmp.ge.s32.totalorder %s21, 1
    %s23 = scalar_select %p22, 0, %s21
    %s24 = sadd.s32 1, %s15
    %s25 = scalar_select %p22, %s24, %s15
    %p26 = scmp.ge.s32.totalorder %s25, 2
    %s27 = scalar_select %p26, 0, %s25
    %s28 = sadd.s32 %s15, %s16
    %s29 = sadd.s32 %s27, %s23
    %s30 = ssub.s32 %s28, %s29
    %p31 = scmp.eq.s32.totalorder %s30, 0
    %s33 = sadd.s32 %s32, 1
    %s34 = scalar_select %p31, %s32, %s33
    %p37 = pneg %p31
    %p38 = scmp.eq.s32.totalorder %s8, 1
    %p39 = por %p37, %p38
    %p40 = scmp.ne.s32.totalorder %s32, %s35
    %p41 = scmp.eq.s32.totalorder %s8, 0
    %p42 = por %p40, %p41
    %p43 = scmp.ne.s32.totalorder %s32, %s35
    %p44 = scmp.eq.s32.totalorder %s13, 1
    %p45 = por %p43, %p44
    %p46 = scmp.ne.s32.totalorder %s35, %s36
    %p47 = scmp.eq.s32.totalorder %s13, 0
    %p48 = por %p46, %p47
    %p49 = scmp.ne.s32.totalorder %s35, %s36
    %p50 = scmp.eq.s32.totalorder %s14, 1
    %p51 = por %p49, %p50
    %p53 = scmp.ne.s32.totalorder %s36, %s52
    %p54 = scmp.eq.s32.totalorder %s14, 0
    %p55 = por %p53, %p54
    %s56 = sadd.s32 %s15, %s16
    %s57 = sadd.s32 %s27, %s23
    %s58 = ssub.s32 %s56, %s57
    %p59 = scmp.eq.s32.totalorder %s58, 0
    %s61 = sadd.s32 %s60, 1
    %s62 = scalar_select %p59, %s60, %s61
    %p65 = pneg %p59
    %p66 = scmp.eq.s32.totalorder %s8, 1
    %p67 = por %p65, %p66
    %p68 = scmp.ne.s32.totalorder %s60, %s63
    %p69 = scmp.eq.s32.totalorder %s8, 0
    %p70 = por %p68, %p69
    %p71 = scmp.ne.s32.totalorder %s60, %s63
    %p72 = scmp.eq.s32.totalorder %s13, 1
    %p73 = por %p71, %p72
    %p74 = scmp.ne.s32.totalorder %s63, %s64
    %p75 = scmp.eq.s32.totalorder %s13, 0
    %p76 = por %p74, %p75
    %p77 = scmp.ne.s32.totalorder %s63, %s64
    %p78 = scmp.eq.s32.totalorder %s14, 1
    %p79 = por %p77, %p78
    %p81 = scmp.ne.s32.totalorder %s64, %s80
    %p82 = scmp.eq.s32.totalorder %s14, 0
    %p83 = por %p81, %p82
    %s84 = ssub.s32 %s15, %s27
    %p85 = scmp.eq.s32.totalorder %s84, 0
    %s87 = sadd.s32 %s86, 1
    %s88 = scalar_select %p85, %s86, %s87
    %p91 = pneg %p85
    %p92 = scmp.eq.s32.totalorder %s8, 1
    %p93 = por %p91, %p92
    %p94 = scmp.ne.s32.totalorder %s86, %s89
    %p95 = scmp.eq.s32.totalorder %s8, 0
    %p96 = por %p94, %p95
    %p97 = scmp.ne.s32.totalorder %s86, %s89
    %p98 = scmp.eq.s32.totalorder %s13, 1
    %p99 = por %p97, %p98
    %p100 = scmp.ne.s32.totalorder %s89, %s90
    %p101 = scmp.eq.s32.totalorder %s13, 0
    %p102 = por %p100, %p101
    %p103 = scmp.ne.s32.totalorder %s89, %s90
    %p104 = scmp.eq.s32.totalorder %s14, 1
    %p105 = por %p103, %p104
    %p107 = scmp.ne.s32.totalorder %s90, %s106
    %p108 = scmp.eq.s32.totalorder %s14, 0
    %p109 = por %p107, %p108
    %p110 = scmp.le.s32.totalorder 1, %s8
    %p111 = scmp.lt.s32.totalorder %s8, 3
    %p112 = pnand %p110, %p111
    %p113 = pneg %p112
    // Predicated region
    $region9: #{mixed_loss.1} parent=5 // pred_check
      _
    $region10: #{mixed_loss.1} parent=5 // pred_check_branch
      %115 = sbr.rel (%p112) target = $region12
    $region11: #{mixed_loss.1} parent=5 // pred_region
      %s116 = ssub.s32 %s8, 1
    $region12: #{mixed_loss.1} parent=5 // pred_fallthru
      _
    %p117 = scmp.lt.s32.totalorder %s8, 2
    // Predicated region
    $region13: #{mixed_loss.1} parent=5 // pred_check
      %p118 = pneg %p117
    $region14: #{mixed_loss.1} parent=5 // pred_check_branch
      %120 = sbr.rel (%p118) target = $region16
    $region15: #{mixed_loss.1} parent=5 // pred_region
      // Predicated region
      $region17: #{mixed_loss.1} parent=15 // pred_check
        %p121 = pneg %p42
      $region18: #{mixed_loss.1} parent=15 // pred_check_branch
        %123 = sbr.rel (%p121) target = $region20
      $region19: #{mixed_loss.1} parent=15 // pred_region
        %s124 = sadd.s32 %s15, %s16
        %p125 = scmp.lt.s32.totalorder %s124, 1
        %s126 = scalar_select %p125, %s124, 1
        %s127 = smul.addr %s126, 8
        %s128 = scalar_lea.vmem %s0, %s127
        %s129 = sadd.s32 %s15, %s16
      $region20: #{mixed_loss.1} parent=15 // pred_fallthru
        _
      // Predicated region
      $region21: #{mixed_loss.1} parent=15 // pred_check
        %p130 = pneg %p70
      $region22: #{mixed_loss.1} parent=15 // pred_check_branch
        %132 = sbr.rel (%p130) target = $region24
      $region23: #{mixed_loss.1} parent=15 // pred_region
        %s133 = sadd.s32 %s15, %s16
        %p134 = scmp.lt.s32.totalorder %s133, 1
        %s135 = scalar_select %p134, %s133, 1
        %s136 = smul.addr %s135, 8
        %s137 = scalar_lea.vmem %s1, %s136
        %s138 = sadd.s32 %s15, %s16
      $region24: #{mixed_loss.1} parent=15 // pred_fallthru
        _
    $region16: #{mixed_loss.1} parent=5 // pred_fallthru
      _
    %p139 = scmp.le.s32.totalorder 1, %s8
    %p140 = scmp.lt.s32.totalorder %s8, 3
    %p141 = pnand %p139, %p140
    %p142 = pneg %p141
    // Predicated region
    $region25: #{mixed_loss.1} parent=5 // pred_check
      _
    $region26: #{mixed_loss.1} parent=5 // pred_check_branch
      %144 = sbr.rel (%p141) target = $region28
    $region27: #{mixed_loss.1} parent=5 // pred_region
      %s145 = ssub.s32 %s8, 1
      %s146 = sadd.s32 %s17, %s18
      %p147 = scmp.lt.s32.totalorder %s146, 1
      %s148 = scalar_select %p147, %s146, 1
      %s149 = smul.addr %s148, 8
      %s150 = scalar_lea.vmem %s0, %s149
      %p151 = pneg %p48
      %p152 = pneg %p45
      %s153 = sadd.s32 %s17, %s18
      %p154 = scmp.lt.s32.totalorder %s153, 1
      %s155 = scalar_select %p154, %s153, 1
      %s156 = smul.addr %s155, 8
      %s157 = scalar_lea.vmem %s1, %s156
      %p158 = pneg %p76
      %p159 = pneg %p73
      %p160 = pneg %p102
      %p161 = pneg %p99
      %p162 = scmp.lt.s32.totalorder %s17, 1
      %s163 = scalar_select %p162, %s17, 1
      %s164 = smul.addr %s163, 4
      %s165 = smul.addr %s164, 8
      %s166 = scalar_lea.vmem %s2, %s165
      %s167 = sadd.s32 %s17, %s18
      %p168 = scmp.lt.s32.totalorder %s167, 1
      %s169 = scalar_select %p168, %s167, 1
      %s170 = smul.addr %s169, 8
      %s171 = scalar_lea.vmem %s0, %s170
      %s172 = sadd.s32 %s17, %s18
      %s173 = sadd.s32 %s17, %s18
      %p174 = scmp.lt.s32.totalorder %s173, 1
      %s175 = scalar_select %p174, %s173, 1
      %s176 = smul.addr %s175, 8
      %s177 = scalar_lea.vmem %s1, %s176
      %s178 = sadd.s32 %s17, %s18
      %p179 = scmp.lt.s32.totalorder %s17, 1
      %s180 = scalar_select %p179, %s17, 1
      %s181 = smul.addr %s180, 4
      %s182 = smul.addr %s181, 8
      %s183 = scalar_lea.vmem %s2, %s182
      %p184 = scmp.eq.s32.totalorder %s18, 0
      // Predicated region
      $region29: #{mixed_loss.1} parent=27 // pred_check
        %p185 = pneg %p184
      $region30: #{mixed_loss.1} parent=27 // pred_check_branch
        %187 = sbr.rel (%p185) target = $region32
      $region31: #{mixed_loss.1} parent=27 // pred_region
        %188 = vst [vmem:[%s183] sm:$0xff] 0.0
        %189 = vst [vmem:[%s183 + $0x8] sm:$0xff] 0.0
        %190 = vst [vmem:[%s183 + $0x10] sm:$0xff] 0.0
        %191 = vst [vmem:[%s183 + $0x18] sm:$0xff] 0.0
      $region32: #{mixed_loss.1} parent=27 // pred_fallthru
        _
      %v192 = vld [vmem:[%s171] sm:$0xff]
      %v193 = vld [vmem:[%s177] sm:$0xff]
      %v194 = vmin.f32 %v192, 0.0
      %v195 = vsub.f32 0.0, %v192
      %v196 = vmin.f32 %v195, 0.0
      %v197 = vmul.f32 %v194, 1.442695
      %v198 = vpow.pop %v197
      %v199 = vmul.f32 %v196, 1.442695
      %v200 = vpow.pop %v199
      %v201 = vadd.f32 %v198, %v200
      %v202 = vlog2.pop %v201
      %v203 = vmul.f32 %v202, 0.6931472
      %v204 = vrcp.pop %v201
      %v205 = vmul.f32 1.0, %v204
      %v206 = vmul.f32 %v192, %v193
      %v207 = vsub.f32 %v192, %v206
      %v208 = vsub.f32 %v207, %v194
      %v209 = vadd.f32 %v208, %v203
      %v210 = vmul.f32 %v198, %v205
      %vm211 = vcmp.gt.f32.partialorder %v193, 0.5
      %v212 = vsel %vm211, %v200, %v198
      %v213 = vmul.f32 %v212, %v205
      %v214 = vmul.f32 %v213, %v213
      %v215 = vmul.f32 %v214, %v209
      %s216 = scalar_lea.vmem %s183, 8
      %v217 = vld [vmem:[%s216] sm:$0xff]
      %v218 = vmul.f32 %v210, %v193
      %v219 = vadd.f32 %v218, 0.0
      %v220 = vadd.f32 %v217, %v219
      %221 = vst [vmem:[%s216] sm:$0xff] %v220
      %s222 = scalar_lea.vmem %s183, 24
      %v223 = vld [vmem:[%s222] sm:$0xff]
      %v224 = vadd.f32 %v193, 0.0
      %v225 = vadd.f32 %v223, %v224
      %226 = vst [vmem:[%s222] sm:$0xff] %v225
      %s227 = sadd.s32 %s17, %s18
      %s228 = smul.u32 %s227, 1024
      %s229 = sadd.s32 %s228, 1024
      %p230 = scmp.le.s32.totalorder %s229, 2048
      // Predicated region
      $region33: #{mixed_loss.1} parent=27 // pred_check
        %p231 = pneg %p230
      $region34: #{mixed_loss.1} parent=27 // pred_check_branch
        %233 = sbr.rel (%p231) target = $region36
      $region35: #{mixed_loss.1} parent=27 // pred_region
        %v234 = vld [vmem:[%s183] sm:$0xff]
        %v235 = vadd.f32 %v215, 0.0
        %v236 = vadd.f32 %v234, %v235
        %237 = vst [vmem:[%s183] sm:$0xff] %v236
        %s238 = scalar_lea.vmem %s183, 16
        %v239 = vld [vmem:[%s238] sm:$0xff]
        %v240 = vadd.f32 %v210, 0.0
        %v241 = vadd.f32 %v239, %v240
        %242 = vst [vmem:[%s238] sm:$0xff] %v241
      $region36: #{mixed_loss.1} parent=27 // pred_fallthru
        _
      %p243 = scmp.gt.s32.totalorder %s229, 2048
      // Predicated region
      $region37: #{mixed_loss.1} parent=27 // pred_check
        %p244 = pneg %p243
      $region38: #{mixed_loss.1} parent=27 // pred_check_branch
        %246 = sbr.rel (%p244) target = $region40
      $region39: #{mixed_loss.1} parent=27 // pred_region
        %v247 = vlaneseq
        %v248 = vshrl.u32 %v247, 7
        %v249 = vlaneseq
        %v250 = vand.u32 %v249, 127
        %v251 = vmul.u32 %v248, 128
        %v252 = vstv %s228
        %v253 = vadd.s32 %v252, %v251
        %v254 = vadd.s32 %v253, %v250
        %vm255 = vcmp.lt.s32.totalorder %v254, 2048
        %v256 = vsel %vm255, 1, 0
        %v257 = vcvt.s32.f32 %v256
        %v258 = vld [vmem:[%s183] sm:$0xff]
        %v259 = vmul.f32 %v215, %v257
        %v260 = vadd.f32 %v259, 0.0
        %v261 = vadd.f32 %v258, %v260
        %262 = vst [vmem:[%s183] sm:$0xff] %v261
        %s263 = scalar_lea.vmem %s183, 16
        %v264 = vld [vmem:[%s263] sm:$0xff]
        %v265 = vmul.f32 %v210, %v257
        %v266 = vadd.f32 %v265, 0.0
        %v267 = vadd.f32 %v264, %v266
        %268 = vst [vmem:[%s263] sm:$0xff] %v267
      $region40: #{mixed_loss.1} parent=27 // pred_fallthru
        _
      %p269 = scmp.lt.s32.totalorder %s17, 1
      %s270 = scalar_select %p269, %s17, 1
      %s271 = smul.addr %s270, 4
      %s272 = smul.addr %s271, 8
      %s273 = scalar_lea.vmem %s2, %s272
      // Predicated region
      $region41: #{mixed_loss.1} parent=27 // pred_check
        %p274 = pneg %p99
      $region42: #{mixed_loss.1} parent=27 // pred_check_branch
        %276 = sbr.rel (%p274) target = $region44
      $region43: #{mixed_loss.1} parent=27 // pred_region
        _
      $region44: #{mixed_loss.1} parent=27 // pred_fallthru
        _
    $region28: #{mixed_loss.1} parent=5 // pred_fallthru
      _
    %p277 = scmp.le.s32.totalorder 2, %s8
    // Predicated region
    $region45: #{mixed_loss.1} parent=5 // pred_check
      %p278 = pneg %p277
    $region46: #{mixed_loss.1} parent=5 // pred_check_branch
      %280 = sbr.rel (%p278) target = $region48
    $region47: #{mixed_loss.1} parent=5 // pred_region
      %s281 = ssub.s32 %s8, 2
      // Predicated region
      $region49: #{mixed_loss.1} parent=47 // pred_check
        %p282 = pneg %p105
      $region50: #{mixed_loss.1} parent=47 // pred_check_branch
        %284 = sbr.rel (%p282) target = $region52
      $region51: #{mixed_loss.1} parent=47 // pred_region
        %p285 = scmp.lt.s32.totalorder %s19, 1
        %s286 = scalar_select %p285, %s19, 1
        %s287 = smul.addr %s286, 4
        %s288 = smul.addr %s287, 8
        %s289 = scalar_lea.vmem %s2, %s288
      $region52: #{mixed_loss.1} parent=47 // pred_fallthru
        _
    $region48: #{mixed_loss.1} parent=5 // pred_fallthru
      _
  $region6: #{mixed_loss.1} parent=0 // loop_footer
    %s12 = sadd.s32 1, %s8
  $region7: #{mixed_loss.1} parent=0 // loop_footer_branch
    %7 = sbr.rel target = $region3
  $region8: #{mixed_loss.1} parent=0 // loop_exit
    _

</llo_original>
